<compile_context>
chip_gen: v7x
topology: tpu7x:2x2x1
jax: 0.10.0
libtpu: 0.0.40
codegen_flags: <defaults>
</compile_context>

<pallas_src>
import functools

import jax
import jax.numpy as jnp
from jax.experimental import pallas as pl
from jax.experimental.pallas import tpu as pltpu

NUM_LAYERS = 3
HIDDEN_DIM = 64
INPUT_CH = 3
OUT_DIM = 3


def _mlp_kernel(x_ref, w0_ref, w1_ref, w2_ref, wo_ref, bo_ref, v_ref):
    # x_ref:  (INPUT_CH, tile_n)  bf16   -- samples on the lane axis
    # w0_ref: (H, INPUT_CH)       f32    -- layer 0, consumed by the VPU
    # w1/w2:  (H, H)              bf16   -- torch orientation, h_new = W @ h
    # wo_ref: (OUT_DIM, H)        bf16
    # bo_ref: (OUT_DIM, 1)        f32
    # v_ref:  (OUT_DIM, tile_n)   f32
    x = x_ref[...].astype(jnp.float32)                      # (3, tile_n)
    w0 = w0_ref[...]                                        # (H, 3) f32

    # Layer 0 on the VPU: K=3 would fill only 3/128 (3/256) of an MXU pass.
    h = (w0[:, 0:1] * x[0:1, :]
         + w0[:, 1:2] * x[1:2, :]
         + w0[:, 2:3] * x[2:3, :])                          # (H, tile_n) f32
    h = jnp.maximum(h, 0.0).astype(jnp.bfloat16)

    # Layers 1, 2 on the MXU (bias-free Linear + ReLU, as in torch).
    h = jnp.dot(w1_ref[...], h, preferred_element_type=jnp.float32)
    h = jnp.maximum(h, 0.0).astype(jnp.bfloat16)
    h = jnp.dot(w2_ref[...], h, preferred_element_type=jnp.float32)
    h = jnp.maximum(h, 0.0).astype(jnp.bfloat16)

    # out: Linear(hidden_dim, 3, bias=True); bias add in f32.
    v = jnp.dot(wo_ref[...], h, preferred_element_type=jnp.float32) + bo_ref[...]
    v_ref[...] = v.astype(v_ref.dtype)
    # TODO(synk): use_f=True branch (out_f / out_f2) not wired in; module default is use_f=False.


def _round_up(x, m):
    return ((x + m - 1) // m) * m


@functools.partial(jax.jit, static_argnames=("tile_n",))
def nerf_small_potential_forward(x, params, *, tile_n=8192):
    """x: (N, INPUT_CH) float32. params: dict of torch-layout (out, in) weights."""
    n, in_ch = x.shape
    assert in_ch == INPUT_CH
    assert tile_n % 128 == 0, "tile_n must be a multiple of 128 (lane width)"

    # Cap the tile so the grid keeps >= 2 steps whenever N allows it
    # (v7x shards the 'parallel' grid axis across its 2 TensorCores).
    half_n = _round_up(max(pl.cdiv(n, 2), 1), 128)
    tile_eff = max(128, min(tile_n, half_n))
    n_pad = pl.cdiv(n, tile_eff) * tile_eff
    grid = (n_pad // tile_eff,)

    # Lane-dense layout: features on the sublane axis, samples on the lane axis.
    x_t = jnp.pad(x, ((0, n_pad - n), (0, 0))).T.astype(jnp.bfloat16)  # (3, n_pad)

    w0 = params["w0"].astype(jnp.float32)            # (H, 3)  -> VPU path
    w1 = params["w1"].astype(jnp.bfloat16)           # (H, H)
    w2 = params["w2"].astype(jnp.bfloat16)           # (H, H)
    wo = params["w_out"].astype(jnp.bfloat16)        # (3, H)
    bo = params["b_out"].reshape(OUT_DIM, 1).astype(jnp.float32)  # (3, 1)

    full = lambda arr: pl.BlockSpec(arr.shape, lambda i: (0, 0))

    weight_elems = (INPUT_CH * HIDDEN_DIM + 2 * HIDDEN_DIM * HIDDEN_DIM
                    + HIDDEN_DIM * OUT_DIM)
    flops = 2 * n_pad * weight_elems
    bytes_accessed = (n_pad * INPUT_CH * 2           # bf16 input
                      + n_pad * OUT_DIM * 4          # f32 output
                      + weight_elems * 2 + OUT_DIM * 4)

    v_t = pl.pallas_call(
        _mlp_kernel,
        out_shape=jax.ShapeDtypeStruct((OUT_DIM, n_pad), jnp.float32),
        grid_spec=pltpu.PrefetchScalarGridSpec(
            num_scalar_prefetch=0,
            grid=grid,
            in_specs=[
                pl.BlockSpec((INPUT_CH, tile_eff), lambda i: (0, i)),
                full(w0),
                full(w1),
                full(w2),
                full(wo),
                full(bo),
            ],
            out_specs=pl.BlockSpec((OUT_DIM, tile_eff), lambda i: (0, i)),
        ),
        compiler_params=pltpu.CompilerParams(
            dimension_semantics=("parallel",),
            vmem_limit_bytes=32 * 1024 * 1024,
        ),
        cost_estimate=pl.CostEstimate(
            flops=flops, transcendentals=0, bytes_accessed=bytes_accessed),
    )(x_t, w0, w1, w2, wo, bo)

    # Slice the pad columns off BEFORE transposing (avoids relayout of pad).
    v = v_t[:, :n].T.astype(x.dtype)        # (N, 3)
    f = jnp.zeros_like(v)                   # use_f == False -> f = v * 0 == zeros
    return v, f


def init_params(key):
    """Deterministic synthetic init matching torch.nn.Linear shapes (out, in)."""
    ks = jax.random.split(key, 5)

    def uniform(k, shape, fan_in):
        bound = 1.0 / jnp.sqrt(fan_in)
        return jax.random.uniform(k, shape, jnp.float32, -bound, bound)

    return {
        "w0": uniform(ks[0], (HIDDEN_DIM, INPUT_CH), INPUT_CH),
        "w1": uniform(ks[1], (HIDDEN_DIM, HIDDEN_DIM), HIDDEN_DIM),
        "w2": uniform(ks[2], (HIDDEN_DIM, HIDDEN_DIM), HIDDEN_DIM),
        "w_out": uniform(ks[3], (OUT_DIM, HIDDEN_DIM), HIDDEN_DIM),
        "b_out": uniform(ks[4], (OUT_DIM,), HIDDEN_DIM),
    }


def reference_forward(x, params):
    """Pure-JAX reference mirroring the kernel's numerics.

    Layer 0: bf16-quantized x, f32 weights, f32 accumulation (VPU path).
    Layers 1,2 and out: bf16 operands, f32 accumulation (MXU path).
    """
    h = jnp.dot(x.astype(jnp.bfloat16).astype(jnp.float32), params["w0"].T)
    h = jnp.maximum(h, 0.0).astype(jnp.bfloat16)
    for name in ("w1", "w2"):
        w = params[name].astype(jnp.bfloat16)
        h = jnp.dot(h, w.T, preferred_element_type=jnp.float32)
        h = jnp.maximum(h, 0.0).astype(jnp.bfloat16)
    wo = params["w_out"].astype(jnp.bfloat16)
    v = jnp.dot(h, wo.T, preferred_element_type=jnp.float32) + params["b_out"][None, :]
    v = v.astype(x.dtype)
    return v, jnp.zeros_like(v)


if __name__ == "__main__":
    key = jax.random.PRNGKey(0)
    k_x, k_p = jax.random.split(key)

    N = 1000  # deliberately NOT a multiple of the tile -> exercises padding + multi-step grid
    x = jax.random.normal(k_x, (N, INPUT_CH), jnp.float32)
    params = init_params(k_p)

    v, f = nerf_small_potential_forward(x, params)
    v, f = jax.block_until_ready(v), jax.block_until_ready(f)

    v_ref, f_ref = reference_forward(x, params)
    assert v.shape == (N, OUT_DIM) and f.shape == (N, OUT_DIM)
    assert jnp.allclose(v, v_ref, atol=1e-3, rtol=1e-3), float(jnp.max(jnp.abs(v - v_ref)))
    assert jnp.allclose(f, f_ref, atol=1e-3, rtol=1e-3)

    print("KERNEL_OK")
</pallas_src>

<mosaic_0001>
module attributes {stable_mosaic.version = 11 : i64} {
  func.func @_mlp_kernel(%arg0: i32, %arg1: memref<3x512xbf16, #tpu.memory_space<vmem>>, %arg2: memref<64x3xf32, #tpu.memory_space<vmem>>, %arg3: memref<64x64xbf16, #tpu.memory_space<vmem>>, %arg4: memref<64x64xbf16, #tpu.memory_space<vmem>>, %arg5: memref<3x64xbf16, #tpu.memory_space<vmem>>, %arg6: memref<3x1xf32, #tpu.memory_space<vmem>>, %arg7: memref<3x512xf32, #tpu.memory_space<vmem>>) attributes {dimension_semantics = [#tpu.dimension_semantics<parallel>], iteration_bounds = array<i64: 2>, scalar_prefetch = 0 : i64, scratch_operands = 0 : i64, tpu.core_type = #tpu.core_type<tc>, window_params = [{transform_indices = @transform_0, window_bounds = array<i64: 3, 512>}, {pipeline_mode = #tpu.pipeline_mode<synchronous>, transform_indices = @transform_1, window_bounds = array<i64: 64, 3>}, {pipeline_mode = #tpu.pipeline_mode<synchronous>, transform_indices = @transform_2, window_bounds = array<i64: 64, 64>}, {pipeline_mode = #tpu.pipeline_mode<synchronous>, transform_indices = @transform_3, window_bounds = array<i64: 64, 64>}, {pipeline_mode = #tpu.pipeline_mode<synchronous>, transform_indices = @transform_4, window_bounds = array<i64: 3, 64>}, {pipeline_mode = #tpu.pipeline_mode<synchronous>, transform_indices = @transform_5, window_bounds = array<i64: 3, 1>}, {transform_indices = @transform_6, window_bounds = array<i64: 3, 512>}]} {
    %c0 = arith.constant 0 : index
    %c0_0 = arith.constant 0 : index
    %0 = vector.load %arg1[%c0, %c0_0] : memref<3x512xbf16, #tpu.memory_space<vmem>>, vector<3x512xbf16>
    %1 = arith.extf %0 : vector<3x512xbf16> to vector<3x512xf32>
    %c0_1 = arith.constant 0 : index
    %c0_2 = arith.constant 0 : index
    %2 = vector.load %arg2[%c0_1, %c0_2] : memref<64x3xf32, #tpu.memory_space<vmem>>, vector<64x3xf32>
    %3 = vector.extract_strided_slice %2 {offsets = [0, 0], sizes = [64, 1], strides = [1, 1]} : vector<64x3xf32> to vector<64x1xf32>
    %4 = vector.extract_strided_slice %1 {offsets = [0, 0], sizes = [1, 512], strides = [1, 1]} : vector<3x512xf32> to vector<1x512xf32>
    %5 = vector.broadcast %3 : vector<64x1xf32> to vector<64x512xf32>
    %6 = vector.broadcast %4 : vector<1x512xf32> to vector<64x512xf32>
    %7 = arith.mulf %5, %6 : vector<64x512xf32>
    %8 = vector.extract_strided_slice %2 {offsets = [0, 1], sizes = [64, 1], strides = [1, 1]} : vector<64x3xf32> to vector<64x1xf32>
    %9 = vector.extract_strided_slice %1 {offsets = [1, 0], sizes = [1, 512], strides = [1, 1]} : vector<3x512xf32> to vector<1x512xf32>
    %10 = vector.broadcast %8 : vector<64x1xf32> to vector<64x512xf32>
    %11 = vector.broadcast %9 : vector<1x512xf32> to vector<64x512xf32>
    %12 = arith.mulf %10, %11 : vector<64x512xf32>
    %13 = arith.addf %7, %12 : vector<64x512xf32>
    %14 = vector.extract_strided_slice %2 {offsets = [0, 2], sizes = [64, 1], strides = [1, 1]} : vector<64x3xf32> to vector<64x1xf32>
    %15 = vector.extract_strided_slice %1 {offsets = [2, 0], sizes = [1, 512], strides = [1, 1]} : vector<3x512xf32> to vector<1x512xf32>
    %16 = vector.broadcast %14 : vector<64x1xf32> to vector<64x512xf32>
    %17 = vector.broadcast %15 : vector<1x512xf32> to vector<64x512xf32>
    %18 = arith.mulf %16, %17 : vector<64x512xf32>
    %19 = arith.addf %13, %18 : vector<64x512xf32>
    %cst = arith.constant 0.000000e+00 : f32
    %20 = vector.broadcast %cst : f32 to vector<64x512xf32>
    %21 = arith.maximumf %19, %20 : vector<64x512xf32>
    %22 = arith.truncf %21 : vector<64x512xf32> to vector<64x512xbf16>
    %c0_3 = arith.constant 0 : index
    %c0_4 = arith.constant 0 : index
    %23 = vector.load %arg3[%c0_3, %c0_4] : memref<64x64xbf16, #tpu.memory_space<vmem>>, vector<64x64xbf16>
    %cst_5 = arith.constant dense<0.000000e+00> : vector<64x512xf32>
    %24 = tpu.matmul %23, %22, %cst_5 {dimension_numbers = #tpu.dot_dimension_numbers<[1], [0], [0], [1], [0, 0, 1, 1], [], []>} : vector<64x64xbf16>, vector<64x512xbf16>, vector<64x512xf32> -> vector<64x512xf32>
    %cst_6 = arith.constant 0.000000e+00 : f32
    %25 = vector.broadcast %cst_6 : f32 to vector<64x512xf32>
    %26 = arith.maximumf %24, %25 : vector<64x512xf32>
    %27 = arith.truncf %26 : vector<64x512xf32> to vector<64x512xbf16>
    %c0_7 = arith.constant 0 : index
    %c0_8 = arith.constant 0 : index
    %28 = vector.load %arg4[%c0_7, %c0_8] : memref<64x64xbf16, #tpu.memory_space<vmem>>, vector<64x64xbf16>
    %cst_9 = arith.constant dense<0.000000e+00> : vector<64x512xf32>
    %29 = tpu.matmul %28, %27, %cst_9 {dimension_numbers = #tpu.dot_dimension_numbers<[1], [0], [0], [1], [0, 0, 1, 1], [], []>} : vector<64x64xbf16>, vector<64x512xbf16>, vector<64x512xf32> -> vector<64x512xf32>
    %cst_10 = arith.constant 0.000000e+00 : f32
    %30 = vector.broadcast %cst_10 : f32 to vector<64x512xf32>
    %31 = arith.maximumf %29, %30 : vector<64x512xf32>
    %32 = arith.truncf %31 : vector<64x512xf32> to vector<64x512xbf16>
    %c0_11 = arith.constant 0 : index
    %c0_12 = arith.constant 0 : index
    %33 = vector.load %arg5[%c0_11, %c0_12] : memref<3x64xbf16, #tpu.memory_space<vmem>>, vector<3x64xbf16>
    %cst_13 = arith.constant dense<0.000000e+00> : vector<3x512xf32>
    %34 = tpu.matmul %33, %32, %cst_13 {dimension_numbers = #tpu.dot_dimension_numbers<[1], [0], [0], [1], [0, 0, 1, 1], [], []>} : vector<3x64xbf16>, vector<64x512xbf16>, vector<3x512xf32> -> vector<3x512xf32>
    %c0_14 = arith.constant 0 : index
    %c0_15 = arith.constant 0 : index
    %35 = vector.load %arg6[%c0_14, %c0_15] : memref<3x1xf32, #tpu.memory_space<vmem>>, vector<3x1xf32>
    %36 = vector.broadcast %35 : vector<3x1xf32> to vector<3x512xf32>
    %37 = arith.addf %34, %36 : vector<3x512xf32>
    %c0_16 = arith.constant 0 : index
    %c0_17 = arith.constant 0 : index
    %38 = vector.load %arg7[%c0_16, %c0_17] : memref<3x512xf32, #tpu.memory_space<vmem>>, vector<3x512xf32>
    tpu.vector_store %arg7[%c0_16, %c0_17], %37 {strides = array<i32>} : memref<3x512xf32, #tpu.memory_space<vmem>>, vector<3x512xf32>,
    return
  }
  func.func @transform_0(%arg0: i32) -> (i32, i32) {
    %c0_i32 = arith.constant 0 : i32
    %c0_i32_0 = arith.constant 0 : i32
    return %c0_i32, %arg0 : i32, i32
  }
  func.func @transform_1(%arg0: i32) -> (i32, i32) {
    %c0_i32 = arith.constant 0 : i32
    %c0_i32_0 = arith.constant 0 : i32
    %c0_i32_1 = arith.constant 0 : i32
    return %c0_i32, %c0_i32_0 : i32, i32
  }
  func.func @transform_2(%arg0: i32) -> (i32, i32) {
    %c0_i32 = arith.constant 0 : i32
    %c0_i32_0 = arith.constant 0 : i32
    %c0_i32_1 = arith.constant 0 : i32
    return %c0_i32, %c0_i32_0 : i32, i32
  }
  func.func @transform_3(%arg0: i32) -> (i32, i32) {
    %c0_i32 = arith.constant 0 : i32
    %c0_i32_0 = arith.constant 0 : i32
    %c0_i32_1 = arith.constant 0 : i32
    return %c0_i32, %c0_i32_0 : i32, i32
  }
  func.func @transform_4(%arg0: i32) -> (i32, i32) {
    %c0_i32 = arith.constant 0 : i32
    %c0_i32_0 = arith.constant 0 : i32
    %c0_i32_1 = arith.constant 0 : i32
    return %c0_i32, %c0_i32_0 : i32, i32
  }
  func.func @transform_5(%arg0: i32) -> (i32, i32) {
    %c0_i32 = arith.constant 0 : i32
    %c0_i32_0 = arith.constant 0 : i32
    %c0_i32_1 = arith.constant 0 : i32
    return %c0_i32, %c0_i32_0 : i32, i32
  }
  func.func @transform_6(%arg0: i32) -> (i32, i32) {
    %c0_i32 = arith.constant 0 : i32
    %c0_i32_0 = arith.constant 0 : i32
    return %c0_i32, %arg0 : i32, i32
  }
}

</mosaic_0001>

<llo_original>
// kernel: nerf_small_potential_forward.1
$region0: #{nerf_small_potential_forward.1}
  #allocation0 [shape = 'u32[]', space=smem, size = 0x4, offset = 0x4, fixed_abs, tag = 'smem constant byte address 0x4 - core index']
  #allocation1 [shape = 'u32[144,128]{1,0:T(1,128)}', space=vmem, size = 0x12000, scoped, tag = 'internal scratch']
  %s0 = inlined_call_operand.vmem [shape: bf16[3,1024], index: 0, kind: input, shape index: {}]
  %s1 = inlined_call_operand.vmem [shape: f32[64,3], index: 1, kind: input, shape index: {}]
  %s2 = inlined_call_operand.vmem [shape: bf16[64,64], index: 2, kind: input, shape index: {}]
  %s3 = inlined_call_operand.vmem [shape: bf16[64,64], index: 3, kind: input, shape index: {}]
  %s4 = inlined_call_operand.vmem [shape: bf16[3,64], index: 4, kind: input, shape index: {}]
  %s5 = inlined_call_operand.vmem [shape: f32[3,1], index: 5, kind: input, shape index: {}]
  %s6 = inlined_call_operand.vmem [shape: f32[3,1024], index: 6, kind: output, shape index: {}]
  %s7 = sld [smem:[#allocation0]]
  $region57: #{nerf_small_potential_forward.1} parent=0
    _
  %s9 = ssub.s32 1, %s7
  %s10 = scalar_select 0, %s9, %s7
  loop: start=0, step=1, limit=4
  $region2: #{nerf_small_potential_forward.1} parent=0 // loop_pre_header
    _
  $region3: #{nerf_small_potential_forward.1} parent=0 // loop_header
    %s12 = sphi 0, %s16
    %p13 = scmp.ge.s32.totalorder %s12, 4
    %s22 = sphi 0, %s24
    %s25 = sphi 0, %s22
    %s26 = sphi 0, %s25
    %s42 = sphi 0, %s26
    %s46 = sphi 0, %s46
    %s48 = sphi 0, %s46
    %s49 = sphi 0, %s48
    %s63 = sphi 0, %s49
    %s67 = sphi 0, %s67
    %s69 = sphi 0, %s67
    %s70 = sphi 0, %s69
    %s84 = sphi 0, %s70
    %s88 = sphi 0, %s88
    %s90 = sphi 0, %s88
    %s91 = sphi 0, %s90
    %s105 = sphi 0, %s91
    %s109 = sphi 0, %s109
    %s111 = sphi 0, %s109
    %s112 = sphi 0, %s111
    %s126 = sphi 0, %s112
    %s130 = sphi 0, %s130
    %s132 = sphi 0, %s130
    %s133 = sphi 0, %s132
    %s147 = sphi 0, %s133
    %s153 = sphi 0, %s155
    %s156 = sphi 0, %s153
    %s157 = sphi 0, %s156
    %s173 = sphi 0, %s157
  $region4: #{nerf_small_potential_forward.1} parent=0 // loop_header_branch
    %15 = sbr.rel (%p13) target = $region8
  $region5: #{nerf_small_potential_forward.1} parent=0 // loop_body
    %s17 = ssub.s32 %s12, 1
    %s18 = ssub.s32 %s12, 2
    %s19 = sadd.s32 %s12, 1
    %s20 = ssub.s32 %s12, %s19
    %p21 = scmp.eq.s32.totalorder %s20, 0
    %s23 = sadd.s32 %s22, 1
    %s24 = scalar_select %p21, %s22, %s23
    %p27 = pneg %p21
    %p28 = scmp.eq.s32.totalorder %s12, 1
    %p29 = por %p27, %p28
    %p30 = scmp.ne.s32.totalorder %s22, %s25
    %p31 = scmp.eq.s32.totalorder %s12, 0
    %p32 = por %p30, %p31
    %p33 = scmp.ne.s32.totalorder %s22, %s25
    %p34 = scmp.eq.s32.totalorder %s17, 1
    %p35 = por %p33, %p34
    %p36 = scmp.ne.s32.totalorder %s25, %s26
    %p37 = scmp.eq.s32.totalorder %s17, 0
    %p38 = por %p36, %p37
    %p39 = scmp.ne.s32.totalorder %s25, %s26
    %p40 = scmp.eq.s32.totalorder %s18, 1
    %p41 = por %p39, %p40
    %p43 = scmp.ne.s32.totalorder %s26, %s42
    %p44 = scmp.eq.s32.totalorder %s18, 0
    %p45 = por %p43, %p44
    %s47 = sadd.s32 %s46, 1
    %p50 = scmp.eq.s32.totalorder %s12, 1
    %p51 = scmp.ne.s32.totalorder %s46, %s48
    %p52 = scmp.eq.s32.totalorder %s12, 0
    %p53 = por %p51, %p52
    %p54 = scmp.ne.s32.totalorder %s46, %s48
    %p55 = scmp.eq.s32.totalorder %s17, 1
    %p56 = por %p54, %p55
    %p57 = scmp.ne.s32.totalorder %s48, %s49
    %p58 = scmp.eq.s32.totalorder %s17, 0
    %p59 = por %p57, %p58
    %p60 = scmp.ne.s32.totalorder %s48, %s49
    %p61 = scmp.eq.s32.totalorder %s18, 1
    %p62 = por %p60, %p61
    %p64 = scmp.ne.s32.totalorder %s49, %s63
    %p65 = scmp.eq.s32.totalorder %s18, 0
    %p66 = por %p64, %p65
    %s68 = sadd.s32 %s67, 1
    %p71 = scmp.eq.s32.totalorder %s12, 1
    %p72 = scmp.ne.s32.totalorder %s67, %s69
    %p73 = scmp.eq.s32.totalorder %s12, 0
    %p74 = por %p72, %p73
    %p75 = scmp.ne.s32.totalorder %s67, %s69
    %p76 = scmp.eq.s32.totalorder %s17, 1
    %p77 = por %p75, %p76
    %p78 = scmp.ne.s32.totalorder %s69, %s70
    %p79 = scmp.eq.s32.totalorder %s17, 0
    %p80 = por %p78, %p79
    %p81 = scmp.ne.s32.totalorder %s69, %s70
    %p82 = scmp.eq.s32.totalorder %s18, 1
    %p83 = por %p81, %p82
    %p85 = scmp.ne.s32.totalorder %s70, %s84
    %p86 = scmp.eq.s32.totalorder %s18, 0
    %p87 = por %p85, %p86
    %s89 = sadd.s32 %s88, 1
    %p92 = scmp.eq.s32.totalorder %s12, 1
    %p93 = scmp.ne.s32.totalorder %s88, %s90
    %p94 = scmp.eq.s32.totalorder %s12, 0
    %p95 = por %p93, %p94
    %p96 = scmp.ne.s32.totalorder %s88, %s90
    %p97 = scmp.eq.s32.totalorder %s17, 1
    %p98 = por %p96, %p97
    %p99 = scmp.ne.s32.totalorder %s90, %s91
    %p100 = scmp.eq.s32.totalorder %s17, 0
    %p101 = por %p99, %p100
    %p102 = scmp.ne.s32.totalorder %s90, %s91
    %p103 = scmp.eq.s32.totalorder %s18, 1
    %p104 = por %p102, %p103
    %p106 = scmp.ne.s32.totalorder %s91, %s105
    %p107 = scmp.eq.s32.totalorder %s18, 0
    %p108 = por %p106, %p107
    %s110 = sadd.s32 %s109, 1
    %p113 = scmp.eq.s32.totalorder %s12, 1
    %p114 = scmp.ne.s32.totalorder %s109, %s111
    %p115 = scmp.eq.s32.totalorder %s12, 0
    %p116 = por %p114, %p115
    %p117 = scmp.ne.s32.totalorder %s109, %s111
    %p118 = scmp.eq.s32.totalorder %s17, 1
    %p119 = por %p117, %p118
    %p120 = scmp.ne.s32.totalorder %s111, %s112
    %p121 = scmp.eq.s32.totalorder %s17, 0
    %p122 = por %p120, %p121
    %p123 = scmp.ne.s32.totalorder %s111, %s112
    %p124 = scmp.eq.s32.totalorder %s18, 1
    %p125 = por %p123, %p124
    %p127 = scmp.ne.s32.totalorder %s112, %s126
    %p128 = scmp.eq.s32.totalorder %s18, 0
    %p129 = por %p127, %p128
    %s131 = sadd.s32 %s130, 1
    %p134 = scmp.eq.s32.totalorder %s12, 1
    %p135 = scmp.ne.s32.totalorder %s130, %s132
    %p136 = scmp.eq.s32.totalorder %s12, 0
    %p137 = por %p135, %p136
    %p138 = scmp.ne.s32.totalorder %s130, %s132
    %p139 = scmp.eq.s32.totalorder %s17, 1
    %p140 = por %p138, %p139
    %p141 = scmp.ne.s32.totalorder %s132, %s133
    %p142 = scmp.eq.s32.totalorder %s17, 0
    %p143 = por %p141, %p142
    %p144 = scmp.ne.s32.totalorder %s132, %s133
    %p145 = scmp.eq.s32.totalorder %s18, 1
    %p146 = por %p144, %p145
    %p148 = scmp.ne.s32.totalorder %s133, %s147
    %p149 = scmp.eq.s32.totalorder %s18, 0
    %p150 = por %p148, %p149
    %s151 = ssub.s32 %s12, %s19
    %p152 = scmp.eq.s32.totalorder %s151, 0
    %s154 = sadd.s32 %s153, 1
    %s155 = scalar_select %p152, %s153, %s154
    %p158 = pneg %p152
    %p159 = scmp.eq.s32.totalorder %s12, 1
    %p160 = por %p158, %p159
    %p161 = scmp.ne.s32.totalorder %s153, %s156
    %p162 = scmp.eq.s32.totalorder %s12, 0
    %p163 = por %p161, %p162
    %p164 = scmp.ne.s32.totalorder %s153, %s156
    %p165 = scmp.eq.s32.totalorder %s17, 1
    %p166 = por %p164, %p165
    %p167 = scmp.ne.s32.totalorder %s156, %s157
    %p168 = scmp.eq.s32.totalorder %s17, 0
    %p169 = por %p167, %p168
    %p170 = scmp.ne.s32.totalorder %s156, %s157
    %p171 = scmp.eq.s32.totalorder %s18, 1
    %p172 = por %p170, %p171
    %p174 = scmp.ne.s32.totalorder %s157, %s173
    %p175 = scmp.eq.s32.totalorder %s18, 0
    %p176 = por %p174, %p175
    %p177 = scmp.le.s32.totalorder 1, %s12
    %p178 = scmp.lt.s32.totalorder %s12, 3
    %p179 = pnand %p177, %p178
    %p180 = pneg %p179
    // Predicated region
    $region9: #{nerf_small_potential_forward.1} parent=5 // pred_check
      _
    $region10: #{nerf_small_potential_forward.1} parent=5 // pred_check_branch
      %182 = sbr.rel (%p179) target = $region12
    $region11: #{nerf_small_potential_forward.1} parent=5 // pred_region
      %s183 = ssub.s32 %s12, 1
      // Predicated region
      $region13: #{nerf_small_potential_forward.1} parent=11 // pred_check
        %p184 = pneg %p59
      $region14: #{nerf_small_potential_forward.1} parent=11 // pred_check_branch
        %186 = sbr.rel (%p184) target = $region16
      $region15: #{nerf_small_potential_forward.1} parent=11 // pred_region
        _
      $region16: #{nerf_small_potential_forward.1} parent=11 // pred_fallthru
        _
      // Predicated region
      $region17: #{nerf_small_potential_forward.1} parent=11 // pred_check
        %p187 = pneg %p80
      $region18: #{nerf_small_potential_forward.1} parent=11 // pred_check_branch
        %189 = sbr.rel (%p187) target = $region20
      $region19: #{nerf_small_potential_forward.1} parent=11 // pred_region
        _
      $region20: #{nerf_small_potential_forward.1} parent=11 // pred_fallthru
        _
      // Predicated region
      $region21: #{nerf_small_potential_forward.1} parent=11 // pred_check
        %p190 = pneg %p101
      $region22: #{nerf_small_potential_forward.1} parent=11 // pred_check_branch
        %192 = sbr.rel (%p190) target = $region24
      $region23: #{nerf_small_potential_forward.1} parent=11 // pred_region
        _
      $region24: #{nerf_small_potential_forward.1} parent=11 // pred_fallthru
        _
      // Predicated region
      $region25: #{nerf_small_potential_forward.1} parent=11 // pred_check
        %p193 = pneg %p122
      $region26: #{nerf_small_potential_forward.1} parent=11 // pred_check_branch
        %195 = sbr.rel (%p193) target = $region28
      $region27: #{nerf_small_potential_forward.1} parent=11 // pred_region
        _
      $region28: #{nerf_small_potential_forward.1} parent=11 // pred_fallthru
        _
      // Predicated region
      $region29: #{nerf_small_potential_forward.1} parent=11 // pred_check
        %p196 = pneg %p143
      $region30: #{nerf_small_potential_forward.1} parent=11 // pred_check_branch
        %198 = sbr.rel (%p196) target = $region32
      $region31: #{nerf_small_potential_forward.1} parent=11 // pred_region
        _
      $region32: #{nerf_small_potential_forward.1} parent=11 // pred_fallthru
        _
    $region12: #{nerf_small_potential_forward.1} parent=5 // pred_fallthru
      _
    %p199 = scmp.lt.s32.totalorder %s12, 2
    // Predicated region
    $region33: #{nerf_small_potential_forward.1} parent=5 // pred_check
      %p200 = pneg %p199
    $region34: #{nerf_small_potential_forward.1} parent=5 // pred_check_branch
      %202 = sbr.rel (%p200) target = $region36
    $region35: #{nerf_small_potential_forward.1} parent=5 // pred_region
      // Predicated region
      $region37: #{nerf_small_potential_forward.1} parent=35 // pred_check
        %p203 = pneg %p32
      $region38: #{nerf_small_potential_forward.1} parent=35 // pred_check_branch
        %205 = sbr.rel (%p203) target = $region40
      $region39: #{nerf_small_potential_forward.1} parent=35 // pred_region
        %s206 = smul.u32 4, %s12
        %p207 = scmp.lt.s32.totalorder %s206, 7
        %s208 = scalar_select %p207, %s206, 7
        %s209 = smul.addr %s208, 2
        %s210 = scalar_lea.vmem %s0, %s209
        %s211 = smul.u32 4, %s12
      $region40: #{nerf_small_potential_forward.1} parent=35 // pred_fallthru
        _
    $region36: #{nerf_small_potential_forward.1} parent=5 // pred_fallthru
      _
    %p212 = scmp.le.s32.totalorder 1, %s12
    %p213 = scmp.lt.s32.totalorder %s12, 3
    %p214 = pnand %p212, %p213
    %p215 = pneg %p214
    // Predicated region
    $region41: #{nerf_small_potential_forward.1} parent=5 // pred_check
      _
    $region42: #{nerf_small_potential_forward.1} parent=5 // pred_check_branch
      %217 = sbr.rel (%p214) target = $region44
    $region43: #{nerf_small_potential_forward.1} parent=5 // pred_region
      %s218 = ssub.s32 %s12, 1
      %s219 = smul.u32 4, %s17
      %p220 = scmp.lt.s32.totalorder %s219, 7
      %s221 = scalar_select %p220, %s219, 7
      %s222 = smul.addr %s221, 2
      %s223 = scalar_lea.vmem %s0, %s222
      %p224 = pneg %p38
      %p225 = pneg %p35
      %p226 = pneg %p59
      %p227 = pneg %p56
      %p228 = pneg %p80
      %p229 = pneg %p77
      %p230 = pneg %p101
      %p231 = pneg %p98
      %p232 = pneg %p122
      %p233 = pneg %p119
      %p234 = pneg %p143
      %p235 = pneg %p140
      %p236 = pneg %p169
      %p237 = pneg %p166
      %s238 = smul.u32 4, %s17
      %p239 = scmp.lt.s32.totalorder %s238, 7
      %s240 = scalar_select %p239, %s238, 7
      %s241 = smul.addr %s240, 4
      %s242 = scalar_lea.vmem %s6, %s241
      %s243 = smul.u32 4, %s17
      %p244 = scmp.lt.s32.totalorder %s243, 7
      %s245 = scalar_select %p244, %s243, 7
      %s246 = smul.addr %s245, 2
      %s247 = scalar_lea.vmem %s0, %s246
      %s248 = smul.u32 4, %s17
      %s249 = smul.u32 4, %s17
      %p250 = scmp.lt.s32.totalorder %s249, 7
      %s251 = scalar_select %p250, %s249, 7
      %s252 = smul.addr %s251, 4
      %s253 = scalar_lea.vmem %s6, %s252
      %s254 = smul.u32 4, %s17
      %v256 = vld [vmem:[%s247] sm:$0xff]
      %v257 = vunpack.c.l.bf16 %v256
      %v258 = vunpack.c.h.bf16 %v256
      %v259 = vld [vmem:[%s1] sm:$0xff]
      %v260 = vld [vmem:[%s1 + $0x8] sm:$0xff]
      %v261 = vld [vmem:[%s1 + $0x10] sm:$0xff]
      %v262 = vld [vmem:[%s1 + $0x18] sm:$0xff]
      %v263 = vld [vmem:[%s1 + $0x20] sm:$0xff]
      %v264 = vld [vmem:[%s1 + $0x28] sm:$0xff]
      %v265 = vld [vmem:[%s1 + $0x30] sm:$0xff]
      %v266 = vld [vmem:[%s1 + $0x38] sm:$0xff]
      %268 = vset.pattern.permute.xlu0 0
      %269 = vperm.xlu0 %268, %v259
      %v270 = vpop.permute.xlu0 %269
      %273 = vset.pattern.permute.xlu0 0
      %274 = vperm.xlu0 %273, %v260
      %v275 = vpop.permute.xlu0 %274
      %278 = vset.pattern.permute.xlu0 0
      %279 = vperm.xlu0 %278, %v261
      %v280 = vpop.permute.xlu0 %279
      %283 = vset.pattern.permute.xlu0 0
      %284 = vperm.xlu0 %283, %v262
      %v285 = vpop.permute.xlu0 %284
      %288 = vset.pattern.permute.xlu0 0
      %289 = vperm.xlu0 %288, %v263
      %v290 = vpop.permute.xlu0 %289
      %293 = vset.pattern.permute.xlu0 0
      %294 = vperm.xlu0 %293, %v264
      %v295 = vpop.permute.xlu0 %294
      %298 = vset.pattern.permute.xlu0 0
      %299 = vperm.xlu0 %298, %v265
      %v300 = vpop.permute.xlu0 %299
      %303 = vset.pattern.permute.xlu0 0
      %304 = vperm.xlu0 %303, %v266
      %v305 = vpop.permute.xlu0 %304
      %v309 = vlaneseq
      %v310 = vshrl.u32 %v309, 7
      %v311 = vsub.s32 0, %v310
      %v312 = vrot.slane %v257, %v311
      %v313 = vlaneseq
      %v314 = vshrl.u32 %v313, 7
      %v315 = vsub.s32 4, %v314
      %v316 = vrot.slane %v257, %v315
      %v317 = vlaneseq
      %v318 = vshrl.u32 %v317, 7
      %v319 = vsub.s32 0, %v318
      %v320 = vrot.slane %v258, %v319
      %v321 = vlaneseq
      %v322 = vshrl.u32 %v321, 7
      %v323 = vsub.s32 4, %v322
      %v324 = vrot.slane %v258, %v323
      %v329 = vlaneseq
      %v330 = vshrl.u32 %v329, 7
      %v331 = vsub.s32 0, %v330
      %v332 = vrot.slane %v312, %v331
      %v333 = vlaneseq
      %v334 = vshrl.u32 %v333, 7
      %v335 = vsub.s32 0, %v334
      %v336 = vrot.slane %v316, %v335
      %v337 = vlaneseq
      %v338 = vshrl.u32 %v337, 7
      %v339 = vsub.s32 0, %v338
      %v340 = vrot.slane %v320, %v339
      %v341 = vlaneseq
      %v342 = vshrl.u32 %v341, 7
      %v343 = vsub.s32 0, %v342
      %v344 = vrot.slane %v324, %v343
      %v345 = vmul.f32 %v270, %v332
      %v346 = vmul.f32 %v270, %v336
      %v347 = vmul.f32 %v270, %v340
      %v348 = vmul.f32 %v270, %v344
      %v349 = vmul.f32 %v275, %v332
      %v350 = vmul.f32 %v275, %v336
      %v351 = vmul.f32 %v275, %v340
      %v352 = vmul.f32 %v275, %v344
      %v353 = vmul.f32 %v280, %v332
      %v354 = vmul.f32 %v280, %v336
      %v355 = vmul.f32 %v280, %v340
      %v356 = vmul.f32 %v280, %v344
      %v357 = vmul.f32 %v285, %v332
      %v358 = vmul.f32 %v285, %v336
      %v359 = vmul.f32 %v285, %v340
      %v360 = vmul.f32 %v285, %v344
      %v361 = vmul.f32 %v290, %v332
      %v362 = vmul.f32 %v290, %v336
      %v363 = vmul.f32 %v290, %v340
      %v364 = vmul.f32 %v290, %v344
      %v365 = vmul.f32 %v295, %v332
      %v366 = vmul.f32 %v295, %v336
      %v367 = vmul.f32 %v295, %v340
      %v368 = vmul.f32 %v295, %v344
      %v369 = vmul.f32 %v300, %v332
      %v370 = vmul.f32 %v300, %v336
      %v371 = vmul.f32 %v300, %v340
      %v372 = vmul.f32 %v300, %v344
      %v373 = vmul.f32 %v305, %v332
      %v374 = vmul.f32 %v305, %v336
      %v375 = vmul.f32 %v305, %v340
      %v376 = vmul.f32 %v305, %v344
      %377 = vset.pattern.permute.xlu0 1
      %378 = vperm.xlu0 %377, %v259
      %v379 = vpop.permute.xlu0 %378
      %381 = vset.pattern.permute.xlu0 1
      %382 = vperm.xlu0 %381, %v260
      %v383 = vpop.permute.xlu0 %382
      %385 = vset.pattern.permute.xlu0 1
      %386 = vperm.xlu0 %385, %v261
      %v387 = vpop.permute.xlu0 %386
      %389 = vset.pattern.permute.xlu0 1
      %390 = vperm.xlu0 %389, %v262
      %v391 = vpop.permute.xlu0 %390
      %393 = vset.pattern.permute.xlu0 1
      %394 = vperm.xlu0 %393, %v263
      %v395 = vpop.permute.xlu0 %394
      %397 = vset.pattern.permute.xlu0 1
      %398 = vperm.xlu0 %397, %v264
      %v399 = vpop.permute.xlu0 %398
      %401 = vset.pattern.permute.xlu0 1
      %402 = vperm.xlu0 %401, %v265
      %v403 = vpop.permute.xlu0 %402
      %405 = vset.pattern.permute.xlu0 1
      %406 = vperm.xlu0 %405, %v266
      %v407 = vpop.permute.xlu0 %406
      %v409 = vlaneseq
      %v410 = vshrl.u32 %v409, 7
      %v411 = vsub.s32 1, %v410
      %v412 = vrot.slane %v257, %v411
      %v413 = vlaneseq
      %v414 = vshrl.u32 %v413, 7
      %v415 = vsub.s32 5, %v414
      %v416 = vrot.slane %v257, %v415
      %v417 = vlaneseq
      %v418 = vshrl.u32 %v417, 7
      %v419 = vsub.s32 1, %v418
      %v420 = vrot.slane %v258, %v419
      %v421 = vlaneseq
      %v422 = vshrl.u32 %v421, 7
      %v423 = vsub.s32 5, %v422
      %v424 = vrot.slane %v258, %v423
      %v429 = vlaneseq
      %v430 = vshrl.u32 %v429, 7
      %v431 = vsub.s32 1, %v430
      %v432 = vrot.slane %v412, %v431
      %v433 = vlaneseq
      %v434 = vshrl.u32 %v433, 7
      %v435 = vsub.s32 1, %v434
      %v436 = vrot.slane %v416, %v435
      %v437 = vlaneseq
      %v438 = vshrl.u32 %v437, 7
      %v439 = vsub.s32 1, %v438
      %v440 = vrot.slane %v420, %v439
      %v441 = vlaneseq
      %v442 = vshrl.u32 %v441, 7
      %v443 = vsub.s32 1, %v442
      %v444 = vrot.slane %v424, %v443
      %v445 = vmul.f32 %v379, %v432
      %v446 = vmul.f32 %v379, %v436
      %v447 = vmul.f32 %v379, %v440
      %v448 = vmul.f32 %v379, %v444
      %v449 = vmul.f32 %v383, %v432
      %v450 = vmul.f32 %v383, %v436
      %v451 = vmul.f32 %v383, %v440
      %v452 = vmul.f32 %v383, %v444
      %v453 = vmul.f32 %v387, %v432
      %v454 = vmul.f32 %v387, %v436
      %v455 = vmul.f32 %v387, %v440
      %v456 = vmul.f32 %v387, %v444
      %v457 = vmul.f32 %v391, %v432
      %v458 = vmul.f32 %v391, %v436
      %v459 = vmul.f32 %v391, %v440
      %v460 = vmul.f32 %v391, %v444
      %v461 = vmul.f32 %v395, %v432
      %v462 = vmul.f32 %v395, %v436
      %v463 = vmul.f32 %v395, %v440
      %v464 = vmul.f32 %v395, %v444
      %v465 = vmul.f32 %v399, %v432
      %v466 = vmul.f32 %v399, %v436
      %v467 = vmul.f32 %v399, %v440
      %v468 = vmul.f32 %v399, %v444
      %v469 = vmul.f32 %v403, %v432
      %v470 = vmul.f32 %v403, %v436
      %v471 = vmul.f32 %v403, %v440
      %v472 = vmul.f32 %v403, %v444
      %v473 = vmul.f32 %v407, %v432
      %v474 = vmul.f32 %v407, %v436
      %v475 = vmul.f32 %v407, %v440
      %v476 = vmul.f32 %v407, %v444
      %v477 = vadd.f32 %v345, %v445
      %v478 = vadd.f32 %v346, %v446
      %v479 = vadd.f32 %v347, %v447
      %v480 = vadd.f32 %v348, %v448
      %v481 = vadd.f32 %v349, %v449
      %v482 = vadd.f32 %v350, %v450
      %v483 = vadd.f32 %v351, %v451
      %v484 = vadd.f32 %v352, %v452
      %v485 = vadd.f32 %v353, %v453
      %v486 = vadd.f32 %v354, %v454
      %v487 = vadd.f32 %v355, %v455
      %v488 = vadd.f32 %v356, %v456
      %v489 = vadd.f32 %v357, %v457
      %v490 = vadd.f32 %v358, %v458
      %v491 = vadd.f32 %v359, %v459
      %v492 = vadd.f32 %v360, %v460
      %v493 = vadd.f32 %v361, %v461
      %v494 = vadd.f32 %v362, %v462
      %v495 = vadd.f32 %v363, %v463
      %v496 = vadd.f32 %v364, %v464
      %v497 = vadd.f32 %v365, %v465
      %v498 = vadd.f32 %v366, %v466
      %v499 = vadd.f32 %v367, %v467
      %v500 = vadd.f32 %v368, %v468
      %v501 = vadd.f32 %v369, %v469
      %v502 = vadd.f32 %v370, %v470
      %v503 = vadd.f32 %v371, %v471
      %v504 = vadd.f32 %v372, %v472
      %v505 = vadd.f32 %v373, %v473
      %v506 = vadd.f32 %v374, %v474
      %v507 = vadd.f32 %v375, %v475
      %v508 = vadd.f32 %v376, %v476
      %509 = vset.pattern.permute.xlu0 2
      %510 = vperm.xlu0 %509, %v259
      %v511 = vpop.permute.xlu0 %510
      %513 = vset.pattern.permute.xlu0 2
      %514 = vperm.xlu0 %513, %v260
      %v515 = vpop.permute.xlu0 %514
      %517 = vset.pattern.permute.xlu0 2
      %518 = vperm.xlu0 %517, %v261
      %v519 = vpop.permute.xlu0 %518
      %521 = vset.pattern.permute.xlu0 2
      %522 = vperm.xlu0 %521, %v262
      %v523 = vpop.permute.xlu0 %522
      %525 = vset.pattern.permute.xlu0 2
      %526 = vperm.xlu0 %525, %v263
      %v527 = vpop.permute.xlu0 %526
      %529 = vset.pattern.permute.xlu0 2
      %530 = vperm.xlu0 %529, %v264
      %v531 = vpop.permute.xlu0 %530
      %533 = vset.pattern.permute.xlu0 2
      %534 = vperm.xlu0 %533, %v265
      %v535 = vpop.permute.xlu0 %534
      %537 = vset.pattern.permute.xlu0 2
      %538 = vperm.xlu0 %537, %v266
      %v539 = vpop.permute.xlu0 %538
      %v541 = vlaneseq
      %v542 = vshrl.u32 %v541, 7
      %v543 = vsub.s32 2, %v542
      %v544 = vrot.slane %v257, %v543
      %v545 = vlaneseq
      %v546 = vshrl.u32 %v545, 7
      %v547 = vsub.s32 6, %v546
      %v548 = vrot.slane %v257, %v547
      %v549 = vlaneseq
      %v550 = vshrl.u32 %v549, 7
      %v551 = vsub.s32 2, %v550
      %v552 = vrot.slane %v258, %v551
      %v553 = vlaneseq
      %v554 = vshrl.u32 %v553, 7
      %v555 = vsub.s32 6, %v554
      %v556 = vrot.slane %v258, %v555
      %v561 = vlaneseq
      %v562 = vshrl.u32 %v561, 7
      %v563 = vsub.s32 2, %v562
      %v564 = vrot.slane %v544, %v563
      %v565 = vlaneseq
      %v566 = vshrl.u32 %v565, 7
      %v567 = vsub.s32 2, %v566
      %v568 = vrot.slane %v548, %v567
      %v569 = vlaneseq
      %v570 = vshrl.u32 %v569, 7
      %v571 = vsub.s32 2, %v570
      %v572 = vrot.slane %v552, %v571
      %v573 = vlaneseq
      %v574 = vshrl.u32 %v573, 7
      %v575 = vsub.s32 2, %v574
      %v576 = vrot.slane %v556, %v575
      %v577 = vmul.f32 %v511, %v564
      %v578 = vmul.f32 %v511, %v568
      %v579 = vmul.f32 %v511, %v572
      %v580 = vmul.f32 %v511, %v576
      %v581 = vmul.f32 %v515, %v564
      %v582 = vmul.f32 %v515, %v568
      %v583 = vmul.f32 %v515, %v572
      %v584 = vmul.f32 %v515, %v576
      %v585 = vmul.f32 %v519, %v564
      %v586 = vmul.f32 %v519, %v568
      %v587 = vmul.f32 %v519, %v572
      %v588 = vmul.f32 %v519, %v576
      %v589 = vmul.f32 %v523, %v564
      %v590 = vmul.f32 %v523, %v568
      %v591 = vmul.f32 %v523, %v572
      %v592 = vmul.f32 %v523, %v576
      %v593 = vmul.f32 %v527, %v564
      %v594 = vmul.f32 %v527, %v568
      %v595 = vmul.f32 %v527, %v572
      %v596 = vmul.f32 %v527, %v576
      %v597 = vmul.f32 %v531, %v564
      %v598 = vmul.f32 %v531, %v568
      %v599 = vmul.f32 %v531, %v572
      %v600 = vmul.f32 %v531, %v576
      %v601 = vmul.f32 %v535, %v564
      %v602 = vmul.f32 %v535, %v568
      %v603 = vmul.f32 %v535, %v572
      %v604 = vmul.f32 %v535, %v576
      %v605 = vmul.f32 %v539, %v564
      %v606 = vmul.f32 %v539, %v568
      %v607 = vmul.f32 %v539, %v572
      %v608 = vmul.f32 %v539, %v576
      %v609 = vadd.f32 %v477, %v577
      %v610 = vadd.f32 %v478, %v578
      %v611 = vadd.f32 %v479, %v579
      %v612 = vadd.f32 %v480, %v580
      %v613 = vadd.f32 %v481, %v581
      %v614 = vadd.f32 %v482, %v582
      %v615 = vadd.f32 %v483, %v583
      %v616 = vadd.f32 %v484, %v584
      %v617 = vadd.f32 %v485, %v585
      %v618 = vadd.f32 %v486, %v586
      %v619 = vadd.f32 %v487, %v587
      %v620 = vadd.f32 %v488, %v588
      %v621 = vadd.f32 %v489, %v589
      %v622 = vadd.f32 %v490, %v590
      %v623 = vadd.f32 %v491, %v591
      %v624 = vadd.f32 %v492, %v592
      %v625 = vadd.f32 %v493, %v593
      %v626 = vadd.f32 %v494, %v594
      %v627 = vadd.f32 %v495, %v595
      %v628 = vadd.f32 %v496, %v596
      %v629 = vadd.f32 %v497, %v597
      %v630 = vadd.f32 %v498, %v598
      %v631 = vadd.f32 %v499, %v599
      %v632 = vadd.f32 %v500, %v600
      %v633 = vadd.f32 %v501, %v601
      %v634 = vadd.f32 %v502, %v602
      %v635 = vadd.f32 %v503, %v603
      %v636 = vadd.f32 %v504, %v604
      %v637 = vadd.f32 %v505, %v605
      %v638 = vadd.f32 %v506, %v606
      %v639 = vadd.f32 %v507, %v607
      %v640 = vadd.f32 %v508, %v608
      %v641 = vmax.f32 %v609, 0.0
      %v642 = vmax.f32 %v610, 0.0
      %v643 = vmax.f32 %v611, 0.0
      %v644 = vmax.f32 %v612, 0.0
      %v645 = vmax.f32 %v613, 0.0
      %v646 = vmax.f32 %v614, 0.0
      %v647 = vmax.f32 %v615, 0.0
      %v648 = vmax.f32 %v616, 0.0
      %v649 = vmax.f32 %v617, 0.0
      %v650 = vmax.f32 %v618, 0.0
      %v651 = vmax.f32 %v619, 0.0
      %v652 = vmax.f32 %v620, 0.0
      %v653 = vmax.f32 %v621, 0.0
      %v654 = vmax.f32 %v622, 0.0
      %v655 = vmax.f32 %v623, 0.0
      %v656 = vmax.f32 %v624, 0.0
      %v657 = vmax.f32 %v625, 0.0
      %v658 = vmax.f32 %v626, 0.0
      %v659 = vmax.f32 %v627, 0.0
      %v660 = vmax.f32 %v628, 0.0
      %v661 = vmax.f32 %v629, 0.0
      %v662 = vmax.f32 %v630, 0.0
      %v663 = vmax.f32 %v631, 0.0
      %v664 = vmax.f32 %v632, 0.0
      %v665 = vmax.f32 %v633, 0.0
      %v666 = vmax.f32 %v634, 0.0
      %v667 = vmax.f32 %v635, 0.0
      %v668 = vmax.f32 %v636, 0.0
      %v669 = vmax.f32 %v637, 0.0
      %v670 = vmax.f32 %v638, 0.0
      %v671 = vmax.f32 %v639, 0.0
      %v672 = vmax.f32 %v640, 0.0
      %v673 = vpack.c.bf16 %v645, %v641
      %v674 = vpack.c.bf16 %v646, %v642
      %v675 = vpack.c.bf16 %v647, %v643
      %v676 = vpack.c.bf16 %v648, %v644
      %v677 = vpack.c.bf16 %v653, %v649
      %v678 = vpack.c.bf16 %v654, %v650
      %v679 = vpack.c.bf16 %v655, %v651
      %v680 = vpack.c.bf16 %v656, %v652
      %v681 = vpack.c.bf16 %v661, %v657
      %v682 = vpack.c.bf16 %v662, %v658
      %v683 = vpack.c.bf16 %v663, %v659
      %v684 = vpack.c.bf16 %v664, %v660
      %v685 = vpack.c.bf16 %v669, %v665
      %v686 = vpack.c.bf16 %v670, %v666
      %v687 = vpack.c.bf16 %v671, %v667
      %v688 = vpack.c.bf16 %v672, %v668
      %v689 = vld [vmem:[%s2] sm:$0xf]
      %v690 = vld [vmem:[%s2 + $0x4] sm:$0xf]
      %v691 = vld [vmem:[%s2 + $0x8] sm:$0xf]
      %v692 = vld [vmem:[%s2 + $0xc] sm:$0xf]
      %v693 = vld [vmem:[%s2 + $0x10] sm:$0xf]
      %v694 = vld [vmem:[%s2 + $0x14] sm:$0xf]
      %v695 = vld [vmem:[%s2 + $0x18] sm:$0xf]
      %v696 = vld [vmem:[%s2 + $0x1c] sm:$0xf]
      %v705 = vunpack.c.l.b16 %v689
      %v706 = vunpack.c.l.b16 %v690
      %v707 = vunpack.c.l.b16 %v691
      %v708 = vunpack.c.l.b16 %v692
      %v709 = vunpack.c.l.b16 %v693
      %v710 = vunpack.c.l.b16 %v694
      %v711 = vunpack.c.l.b16 %v695
      %v712 = vunpack.c.l.b16 %v696
      %v713 = vpack.c.b16 %v706, %v705
      %v714 = vpack.c.b16 %v708, %v707
      %v715 = vpack.c.b16 %v710, %v709
      %v716 = vpack.c.b16 %v712, %v711
      %vm717 = vcmask 523264
      %v719 = vsel %vm717, %v713, 0
      %v722 = vsel %vm717, %v714, 0
      %v725 = vsel %vm717, %v715, 0
      %v728 = vsel %vm717, %v716, 0
      %730 = vmatprep.subr.bf16.mxu0 %v674
      %731 = vmatpush1.bf16.msra.mxu0 %v673
      %732 = vmatprep.subr.bf16.mxu0 %v678
      %733 = vmatpush1.bf16.msra.mxu0 %v677
      %734 = vmatprep.subr.bf16.mxu0 %v682
      %735 = vmatpush1.bf16.msra.mxu0 %v681
      %736 = vmatprep.subr.bf16.mxu0 %v686
      %737 = vmatpush1.bf16.msra.mxu0 %v685
      %738 = vmatprep.subr.bf16.mxu0 0
      %739 = vmatpush1.bf16.msra.mxu0 0
      %740 = vmatprep.subr.bf16.mxu0 0
      %741 = vmatpush1.bf16.msra.mxu0 0
      %742 = vmatprep.subr.bf16.mxu0 0
      %743 = vmatpush1.bf16.msra.mxu0 0
      %744 = vmatprep.subr.bf16.mxu0 0
      %745 = vmatpush1.bf16.msra.mxu0 0
      %746 = vmatprep.subr.bf16.mxu0 0
      %747 = vmatpush1.bf16.msra.mxu0 0
      %748 = vmatprep.subr.bf16.mxu0 0
      %749 = vmatpush1.bf16.msra.mxu0 0
      %750 = vmatprep.subr.bf16.mxu0 0
      %751 = vmatpush1.bf16.msra.mxu0 0
      %752 = vmatprep.subr.bf16.mxu0 0
      %753 = vmatpush1.bf16.msra.mxu0 0
      %754 = vmatprep.subr.bf16.mxu0 0
      %755 = vmatpush1.bf16.msra.mxu0 0
      %756 = vmatprep.subr.bf16.mxu0 0
      %757 = vmatpush1.bf16.msra.mxu0 0
      %758 = vmatprep.subr.bf16.mxu0 0
      %759 = vmatpush1.bf16.msra.mxu0 0
      %760 = vmatprep.subr.bf16.mxu0 0
      %761 = vmatpush1.bf16.msra.mxu0 0
      %762 = vmatprep.mubr.bf16.mxu0 0
      %763 = vmatmul.mubr.bf16.gmra.mrb[0].mxu0 %v719
      %v764 = vpop.f32.mrb[0].mxu0
      %v765 = vadd.f32 0.0, %v764
      %v766 = vpop.f32.mrb[0].mxu0
      %v767 = vadd.f32 0.0, %v766
      %v768 = vpop.f32.mrb[0].mxu0
      %v769 = vadd.f32 0.0, %v768
      %v770 = vpop.f32.mrb[0].mxu0
      %v771 = vadd.f32 0.0, %v770
      %772 = vmatprep.mubr.bf16.mxu0 0
      %773 = vmatmul.mubr.bf16.gmra.mrb[0].mxu0 %v722
      %v774 = vpop.f32.mrb[0].mxu0
      %v775 = vadd.f32 0.0, %v774
      %v776 = vpop.f32.mrb[0].mxu0
      %v777 = vadd.f32 0.0, %v776
      %v778 = vpop.f32.mrb[0].mxu0
      %v779 = vadd.f32 0.0, %v778
      %v780 = vpop.f32.mrb[0].mxu0
      %v781 = vadd.f32 0.0, %v780
      %782 = vmatprep.mubr.bf16.mxu0 0
      %783 = vmatmul.mubr.bf16.gmra.mrb[0].mxu0 %v725
      %v784 = vpop.f32.mrb[0].mxu0
      %v785 = vadd.f32 0.0, %v784
      %v786 = vpop.f32.mrb[0].mxu0
      %v787 = vadd.f32 0.0, %v786
      %v788 = vpop.f32.mrb[0].mxu0
      %v789 = vadd.f32 0.0, %v788
      %v790 = vpop.f32.mrb[0].mxu0
      %v791 = vadd.f32 0.0, %v790
      %792 = vmatprep.mubr.bf16.mxu0 0
      %793 = vmatmul.mubr.bf16.gmra.mrb[0].mxu0 %v728
      %v794 = vpop.f32.mrb[0].mxu0
      %v795 = vadd.f32 0.0, %v794
      %v796 = vpop.f32.mrb[0].mxu0
      %v797 = vadd.f32 0.0, %v796
      %v798 = vpop.f32.mrb[0].mxu0
      %v799 = vadd.f32 0.0, %v798
      %v800 = vpop.f32.mrb[0].mxu0
      %v801 = vadd.f32 0.0, %v800
      %802 = vdwg.mxu0
      %803 = vmatprep.subr.bf16.mxu0 %v676
      %804 = vmatpush1.bf16.msra.mxu0 %v675
      %805 = vmatprep.subr.bf16.mxu0 %v680
      %806 = vmatpush1.bf16.msra.mxu0 %v679
      %807 = vmatprep.subr.bf16.mxu0 %v684
      %808 = vmatpush1.bf16.msra.mxu0 %v683
      %809 = vmatprep.subr.bf16.mxu0 %v688
      %810 = vmatpush1.bf16.msra.mxu0 %v687
      %811 = vmatprep.subr.bf16.mxu0 0
      %812 = vmatpush1.bf16.msra.mxu0 0
      %813 = vmatprep.subr.bf16.mxu0 0
      %814 = vmatpush1.bf16.msra.mxu0 0
      %815 = vmatprep.subr.bf16.mxu0 0
      %816 = vmatpush1.bf16.msra.mxu0 0
      %817 = vmatprep.subr.bf16.mxu0 0
      %818 = vmatpush1.bf16.msra.mxu0 0
      %819 = vmatprep.subr.bf16.mxu0 0
      %820 = vmatpush1.bf16.msra.mxu0 0
      %821 = vmatprep.subr.bf16.mxu0 0
      %822 = vmatpush1.bf16.msra.mxu0 0
      %823 = vmatprep.subr.bf16.mxu0 0
      %824 = vmatpush1.bf16.msra.mxu0 0
      %825 = vmatprep.subr.bf16.mxu0 0
      %826 = vmatpush1.bf16.msra.mxu0 0
      %827 = vmatprep.subr.bf16.mxu0 0
      %828 = vmatpush1.bf16.msra.mxu0 0
      %829 = vmatprep.subr.bf16.mxu0 0
      %830 = vmatpush1.bf16.msra.mxu0 0
      %831 = vmatprep.subr.bf16.mxu0 0
      %832 = vmatpush1.bf16.msra.mxu0 0
      %833 = vmatprep.subr.bf16.mxu0 0
      %834 = vmatpush1.bf16.msra.mxu0 0
      %835 = vmatprep.mubr.bf16.mxu0 0
      %836 = vmatmul.mubr.bf16.gmra.mrb[0].mxu0 %v719
      %v837 = vpop.f32.mrb[0].mxu0
      %v838 = vadd.f32 0.0, %v837
      %v839 = vpop.f32.mrb[0].mxu0
      %v840 = vadd.f32 0.0, %v839
      %v841 = vpop.f32.mrb[0].mxu0
      %v842 = vadd.f32 0.0, %v841
      %v843 = vpop.f32.mrb[0].mxu0
      %v844 = vadd.f32 0.0, %v843
      %845 = vmatprep.mubr.bf16.mxu0 0
      %846 = vmatmul.mubr.bf16.gmra.mrb[0].mxu0 %v722
      %v847 = vpop.f32.mrb[0].mxu0
      %v848 = vadd.f32 0.0, %v847
      %v849 = vpop.f32.mrb[0].mxu0
      %v850 = vadd.f32 0.0, %v849
      %v851 = vpop.f32.mrb[0].mxu0
      %v852 = vadd.f32 0.0, %v851
      %v853 = vpop.f32.mrb[0].mxu0
      %v854 = vadd.f32 0.0, %v853
      %855 = vmatprep.mubr.bf16.mxu0 0
      %856 = vmatmul.mubr.bf16.gmra.mrb[0].mxu0 %v725
      %v857 = vpop.f32.mrb[0].mxu0
      %v858 = vadd.f32 0.0, %v857
      %v859 = vpop.f32.mrb[0].mxu0
      %v860 = vadd.f32 0.0, %v859
      %v861 = vpop.f32.mrb[0].mxu0
      %v862 = vadd.f32 0.0, %v861
      %v863 = vpop.f32.mrb[0].mxu0
      %v864 = vadd.f32 0.0, %v863
      %865 = vmatprep.mubr.bf16.mxu0 0
      %866 = vmatmul.mubr.bf16.gmra.mrb[0].mxu0 %v728
      %v867 = vpop.f32.mrb[0].mxu0
      %v868 = vadd.f32 0.0, %v867
      %v869 = vpop.f32.mrb[0].mxu0
      %v870 = vadd.f32 0.0, %v869
      %v871 = vpop.f32.mrb[0].mxu0
      %v872 = vadd.f32 0.0, %v871
      %v873 = vpop.f32.mrb[0].mxu0
      %v874 = vadd.f32 0.0, %v873
      %875 = vdwg.mxu0
      %v876 = vmax.f32 %v765, 0.0
      %v877 = vmax.f32 %v767, 0.0
      %v878 = vmax.f32 %v838, 0.0
      %v879 = vmax.f32 %v840, 0.0
      %v880 = vmax.f32 %v769, 0.0
      %v881 = vmax.f32 %v771, 0.0
      %v882 = vmax.f32 %v842, 0.0
      %v883 = vmax.f32 %v844, 0.0
      %v884 = vmax.f32 %v775, 0.0
      %v885 = vmax.f32 %v777, 0.0
      %v886 = vmax.f32 %v848, 0.0
      %v887 = vmax.f32 %v850, 0.0
      %v888 = vmax.f32 %v779, 0.0
      %v889 = vmax.f32 %v781, 0.0
      %v890 = vmax.f32 %v852, 0.0
      %v891 = vmax.f32 %v854, 0.0
      %v892 = vmax.f32 %v785, 0.0
      %v893 = vmax.f32 %v787, 0.0
      %v894 = vmax.f32 %v858, 0.0
      %v895 = vmax.f32 %v860, 0.0
      %v896 = vmax.f32 %v789, 0.0
      %v897 = vmax.f32 %v791, 0.0
      %v898 = vmax.f32 %v862, 0.0
      %v899 = vmax.f32 %v864, 0.0
      %v900 = vmax.f32 %v795, 0.0
      %v901 = vmax.f32 %v797, 0.0
      %v902 = vmax.f32 %v868, 0.0
      %v903 = vmax.f32 %v870, 0.0
      %v904 = vmax.f32 %v799, 0.0
      %v905 = vmax.f32 %v801, 0.0
      %v906 = vmax.f32 %v872, 0.0
      %v907 = vmax.f32 %v874, 0.0
      %v908 = vpack.c.bf16 %v880, %v876
      %v909 = vpack.c.bf16 %v881, %v877
      %v910 = vpack.c.bf16 %v882, %v878
      %v911 = vpack.c.bf16 %v883, %v879
      %v912 = vpack.c.bf16 %v888, %v884
      %v913 = vpack.c.bf16 %v889, %v885
      %v914 = vpack.c.bf16 %v890, %v886
      %v915 = vpack.c.bf16 %v891, %v887
      %v916 = vpack.c.bf16 %v896, %v892
      %v917 = vpack.c.bf16 %v897, %v893
      %v918 = vpack.c.bf16 %v898, %v894
      %v919 = vpack.c.bf16 %v899, %v895
      %v920 = vpack.c.bf16 %v904, %v900
      %v921 = vpack.c.bf16 %v905, %v901
      %v922 = vpack.c.bf16 %v906, %v902
      %v923 = vpack.c.bf16 %v907, %v903
      %v924 = vld [vmem:[%s3] sm:$0xf]
      %v925 = vld [vmem:[%s3 + $0x4] sm:$0xf]
      %v926 = vld [vmem:[%s3 + $0x8] sm:$0xf]
      %v927 = vld [vmem:[%s3 + $0xc] sm:$0xf]
      %v928 = vld [vmem:[%s3 + $0x10] sm:$0xf]
      %v929 = vld [vmem:[%s3 + $0x14] sm:$0xf]
      %v930 = vld [vmem:[%s3 + $0x18] sm:$0xf]
      %v931 = vld [vmem:[%s3 + $0x1c] sm:$0xf]
      %v940 = vunpack.c.l.b16 %v924
      %v941 = vunpack.c.l.b16 %v925
      %v942 = vunpack.c.l.b16 %v926
      %v943 = vunpack.c.l.b16 %v927
      %v944 = vunpack.c.l.b16 %v928
      %v945 = vunpack.c.l.b16 %v929
      %v946 = vunpack.c.l.b16 %v930
      %v947 = vunpack.c.l.b16 %v931
      %v948 = vpack.c.b16 %v941, %v940
      %v949 = vpack.c.b16 %v943, %v942
      %v950 = vpack.c.b16 %v945, %v944
      %v951 = vpack.c.b16 %v947, %v946
      %v953 = vsel %vm717, %v948, 0
      %v956 = vsel %vm717, %v949, 0
      %v959 = vsel %vm717, %v950, 0
      %v962 = vsel %vm717, %v951, 0
      %964 = vmatprep.subr.bf16.mxu0 %v909
      %965 = vmatpush1.bf16.msra.mxu0 %v908
      %966 = vmatprep.subr.bf16.mxu0 %v913
      %967 = vmatpush1.bf16.msra.mxu0 %v912
      %968 = vmatprep.subr.bf16.mxu0 %v917
      %969 = vmatpush1.bf16.msra.mxu0 %v916
      %970 = vmatprep.subr.bf16.mxu0 %v921
      %971 = vmatpush1.bf16.msra.mxu0 %v920
      %972 = vmatprep.subr.bf16.mxu0 0
      %973 = vmatpush1.bf16.msra.mxu0 0
      %974 = vmatprep.subr.bf16.mxu0 0
      %975 = vmatpush1.bf16.msra.mxu0 0
      %976 = vmatprep.subr.bf16.mxu0 0
      %977 = vmatpush1.bf16.msra.mxu0 0
      %978 = vmatprep.subr.bf16.mxu0 0
      %979 = vmatpush1.bf16.msra.mxu0 0
      %980 = vmatprep.subr.bf16.mxu0 0
      %981 = vmatpush1.bf16.msra.mxu0 0
      %982 = vmatprep.subr.bf16.mxu0 0
      %983 = vmatpush1.bf16.msra.mxu0 0
      %984 = vmatprep.subr.bf16.mxu0 0
      %985 = vmatpush1.bf16.msra.mxu0 0
      %986 = vmatprep.subr.bf16.mxu0 0
      %987 = vmatpush1.bf16.msra.mxu0 0
      %988 = vmatprep.subr.bf16.mxu0 0
      %989 = vmatpush1.bf16.msra.mxu0 0
      %990 = vmatprep.subr.bf16.mxu0 0
      %991 = vmatpush1.bf16.msra.mxu0 0
      %992 = vmatprep.subr.bf16.mxu0 0
      %993 = vmatpush1.bf16.msra.mxu0 0
      %994 = vmatprep.subr.bf16.mxu0 0
      %995 = vmatpush1.bf16.msra.mxu0 0
      %996 = vmatprep.mubr.bf16.mxu0 0
      %997 = vmatmul.mubr.bf16.gmra.mrb[0].mxu0 %v953
      %v998 = vpop.f32.mrb[0].mxu0
      %v999 = vadd.f32 0.0, %v998
      %v1000 = vpop.f32.mrb[0].mxu0
      %v1001 = vadd.f32 0.0, %v1000
      %v1002 = vpop.f32.mrb[0].mxu0
      %v1003 = vadd.f32 0.0, %v1002
      %v1004 = vpop.f32.mrb[0].mxu0
      %v1005 = vadd.f32 0.0, %v1004
      %1006 = vmatprep.mubr.bf16.mxu0 0
      %1007 = vmatmul.mubr.bf16.gmra.mrb[0].mxu0 %v956
      %v1008 = vpop.f32.mrb[0].mxu0
      %v1009 = vadd.f32 0.0, %v1008
      %v1010 = vpop.f32.mrb[0].mxu0
      %v1011 = vadd.f32 0.0, %v1010
      %v1012 = vpop.f32.mrb[0].mxu0
      %v1013 = vadd.f32 0.0, %v1012
      %v1014 = vpop.f32.mrb[0].mxu0
      %v1015 = vadd.f32 0.0, %v1014
      %1016 = vmatprep.mubr.bf16.mxu0 0
      %1017 = vmatmul.mubr.bf16.gmra.mrb[0].mxu0 %v959
      %v1018 = vpop.f32.mrb[0].mxu0
      %v1019 = vadd.f32 0.0, %v1018
      %v1020 = vpop.f32.mrb[0].mxu0
      %v1021 = vadd.f32 0.0, %v1020
      %v1022 = vpop.f32.mrb[0].mxu0
      %v1023 = vadd.f32 0.0, %v1022
      %v1024 = vpop.f32.mrb[0].mxu0
      %v1025 = vadd.f32 0.0, %v1024
      %1026 = vmatprep.mubr.bf16.mxu0 0
      %1027 = vmatmul.mubr.bf16.gmra.mrb[0].mxu0 %v962
      %v1028 = vpop.f32.mrb[0].mxu0
      %v1029 = vadd.f32 0.0, %v1028
      %v1030 = vpop.f32.mrb[0].mxu0
      %v1031 = vadd.f32 0.0, %v1030
      %v1032 = vpop.f32.mrb[0].mxu0
      %v1033 = vadd.f32 0.0, %v1032
      %v1034 = vpop.f32.mrb[0].mxu0
      %v1035 = vadd.f32 0.0, %v1034
      %1036 = vdwg.mxu0
      %1037 = vmatprep.subr.bf16.mxu0 %v911
      %1038 = vmatpush1.bf16.msra.mxu0 %v910
      %1039 = vmatprep.subr.bf16.mxu0 %v915
      %1040 = vmatpush1.bf16.msra.mxu0 %v914
      %1041 = vmatprep.subr.bf16.mxu0 %v919
      %1042 = vmatpush1.bf16.msra.mxu0 %v918
      %1043 = vmatprep.subr.bf16.mxu0 %v923
      %1044 = vmatpush1.bf16.msra.mxu0 %v922
      %1045 = vmatprep.subr.bf16.mxu0 0
      %1046 = vmatpush1.bf16.msra.mxu0 0
      %1047 = vmatprep.subr.bf16.mxu0 0
      %1048 = vmatpush1.bf16.msra.mxu0 0
      %1049 = vmatprep.subr.bf16.mxu0 0
      %1050 = vmatpush1.bf16.msra.mxu0 0
      %1051 = vmatprep.subr.bf16.mxu0 0
      %1052 = vmatpush1.bf16.msra.mxu0 0
      %1053 = vmatprep.subr.bf16.mxu0 0
      %1054 = vmatpush1.bf16.msra.mxu0 0
      %1055 = vmatprep.subr.bf16.mxu0 0
      %1056 = vmatpush1.bf16.msra.mxu0 0
      %1057 = vmatprep.subr.bf16.mxu0 0
      %1058 = vmatpush1.bf16.msra.mxu0 0
      %1059 = vmatprep.subr.bf16.mxu0 0
      %1060 = vmatpush1.bf16.msra.mxu0 0
      %1061 = vmatprep.subr.bf16.mxu0 0
      %1062 = vmatpush1.bf16.msra.mxu0 0
      %1063 = vmatprep.subr.bf16.mxu0 0
      %1064 = vmatpush1.bf16.msra.mxu0 0
      %1065 = vmatprep.subr.bf16.mxu0 0
      %1066 = vmatpush1.bf16.msra.mxu0 0
      %1067 = vmatprep.subr.bf16.mxu0 0
      %1068 = vmatpush1.bf16.msra.mxu0 0
      %1069 = vmatprep.mubr.bf16.mxu0 0
      %1070 = vmatmul.mubr.bf16.gmra.mrb[0].mxu0 %v953
      %v1071 = vpop.f32.mrb[0].mxu0
      %v1072 = vadd.f32 0.0, %v1071
      %v1073 = vpop.f32.mrb[0].mxu0
      %v1074 = vadd.f32 0.0, %v1073
      %v1075 = vpop.f32.mrb[0].mxu0
      %v1076 = vadd.f32 0.0, %v1075
      %v1077 = vpop.f32.mrb[0].mxu0
      %v1078 = vadd.f32 0.0, %v1077
      %1079 = vmatprep.mubr.bf16.mxu0 0
      %1080 = vmatmul.mubr.bf16.gmra.mrb[0].mxu0 %v956
      %v1081 = vpop.f32.mrb[0].mxu0
      %v1082 = vadd.f32 0.0, %v1081
      %v1083 = vpop.f32.mrb[0].mxu0
      %v1084 = vadd.f32 0.0, %v1083
      %v1085 = vpop.f32.mrb[0].mxu0
      %v1086 = vadd.f32 0.0, %v1085
      %v1087 = vpop.f32.mrb[0].mxu0
      %v1088 = vadd.f32 0.0, %v1087
      %1089 = vmatprep.mubr.bf16.mxu0 0
      %1090 = vmatmul.mubr.bf16.gmra.mrb[0].mxu0 %v959
      %v1091 = vpop.f32.mrb[0].mxu0
      %v1092 = vadd.f32 0.0, %v1091
      %v1093 = vpop.f32.mrb[0].mxu0
      %v1094 = vadd.f32 0.0, %v1093
      %v1095 = vpop.f32.mrb[0].mxu0
      %v1096 = vadd.f32 0.0, %v1095
      %v1097 = vpop.f32.mrb[0].mxu0
      %v1098 = vadd.f32 0.0, %v1097
      %1099 = vmatprep.mubr.bf16.mxu0 0
      %1100 = vmatmul.mubr.bf16.gmra.mrb[0].mxu0 %v962
      %v1101 = vpop.f32.mrb[0].mxu0
      %v1102 = vadd.f32 0.0, %v1101
      %v1103 = vpop.f32.mrb[0].mxu0
      %v1104 = vadd.f32 0.0, %v1103
      %v1105 = vpop.f32.mrb[0].mxu0
      %v1106 = vadd.f32 0.0, %v1105
      %v1107 = vpop.f32.mrb[0].mxu0
      %v1108 = vadd.f32 0.0, %v1107
      %1109 = vdwg.mxu0
      %v1110 = vmax.f32 %v999, 0.0
      %v1111 = vmax.f32 %v1001, 0.0
      %v1112 = vmax.f32 %v1072, 0.0
      %v1113 = vmax.f32 %v1074, 0.0
      %v1114 = vmax.f32 %v1003, 0.0
      %v1115 = vmax.f32 %v1005, 0.0
      %v1116 = vmax.f32 %v1076, 0.0
      %v1117 = vmax.f32 %v1078, 0.0
      %v1118 = vmax.f32 %v1009, 0.0
      %v1119 = vmax.f32 %v1011, 0.0
      %v1120 = vmax.f32 %v1082, 0.0
      %v1121 = vmax.f32 %v1084, 0.0
      %v1122 = vmax.f32 %v1013, 0.0
      %v1123 = vmax.f32 %v1015, 0.0
      %v1124 = vmax.f32 %v1086, 0.0
      %v1125 = vmax.f32 %v1088, 0.0
      %v1126 = vmax.f32 %v1019, 0.0
      %v1127 = vmax.f32 %v1021, 0.0
      %v1128 = vmax.f32 %v1092, 0.0
      %v1129 = vmax.f32 %v1094, 0.0
      %v1130 = vmax.f32 %v1023, 0.0
      %v1131 = vmax.f32 %v1025, 0.0
      %v1132 = vmax.f32 %v1096, 0.0
      %v1133 = vmax.f32 %v1098, 0.0
      %v1134 = vmax.f32 %v1029, 0.0
      %v1135 = vmax.f32 %v1031, 0.0
      %v1136 = vmax.f32 %v1102, 0.0
      %v1137 = vmax.f32 %v1104, 0.0
      %v1138 = vmax.f32 %v1033, 0.0
      %v1139 = vmax.f32 %v1035, 0.0
      %v1140 = vmax.f32 %v1106, 0.0
      %v1141 = vmax.f32 %v1108, 0.0
      %v1142 = vpack.c.bf16 %v1114, %v1110
      %v1143 = vpack.c.bf16 %v1115, %v1111
      %v1144 = vpack.c.bf16 %v1116, %v1112
      %v1145 = vpack.c.bf16 %v1117, %v1113
      %v1146 = vpack.c.bf16 %v1122, %v1118
      %v1147 = vpack.c.bf16 %v1123, %v1119
      %v1148 = vpack.c.bf16 %v1124, %v1120
      %v1149 = vpack.c.bf16 %v1125, %v1121
      %v1150 = vpack.c.bf16 %v1130, %v1126
      %v1151 = vpack.c.bf16 %v1131, %v1127
      %v1152 = vpack.c.bf16 %v1132, %v1128
      %v1153 = vpack.c.bf16 %v1133, %v1129
      %v1154 = vpack.c.bf16 %v1138, %v1134
      %v1155 = vpack.c.bf16 %v1139, %v1135
      %v1156 = vpack.c.bf16 %v1140, %v1136
      %v1157 = vpack.c.bf16 %v1141, %v1137
      %v1158 = vld [vmem:[%s4] sm:$0x3]
      %v1159 = vld [vmem:[%s5] sm:$0x7]
      %1161 = vset.pattern.permute.xlu0 0
      %1162 = vperm.xlu0 %1161, %v1159
      %v1163 = vpop.permute.xlu0 %1162
      %v1166 = vsel %vm717, %v1158, 0
      %1168 = vmatprep.subr.bf16.mxu0 %v1143
      %1169 = vmatpush1.bf16.msra.mxu0 %v1142
      %1170 = vmatprep.subr.bf16.mxu0 %v1147
      %1171 = vmatpush1.bf16.msra.mxu0 %v1146
      %1172 = vmatprep.subr.bf16.mxu0 %v1151
      %1173 = vmatpush1.bf16.msra.mxu0 %v1150
      %1174 = vmatprep.subr.bf16.mxu0 %v1155
      %1175 = vmatpush1.bf16.msra.mxu0 %v1154
      %1176 = vmatprep.subr.bf16.mxu0 0
      %1177 = vmatpush1.bf16.msra.mxu0 0
      %1178 = vmatprep.subr.bf16.mxu0 0
      %1179 = vmatpush1.bf16.msra.mxu0 0
      %1180 = vmatprep.subr.bf16.mxu0 0
      %1181 = vmatpush1.bf16.msra.mxu0 0
      %1182 = vmatprep.subr.bf16.mxu0 0
      %1183 = vmatpush1.bf16.msra.mxu0 0
      %1184 = vmatprep.subr.bf16.mxu0 0
      %1185 = vmatpush1.bf16.msra.mxu0 0
      %1186 = vmatprep.subr.bf16.mxu0 0
      %1187 = vmatpush1.bf16.msra.mxu0 0
      %1188 = vmatprep.subr.bf16.mxu0 0
      %1189 = vmatpush1.bf16.msra.mxu0 0
      %1190 = vmatprep.subr.bf16.mxu0 0
      %1191 = vmatpush1.bf16.msra.mxu0 0
      %1192 = vmatprep.subr.bf16.mxu0 0
      %1193 = vmatpush1.bf16.msra.mxu0 0
      %1194 = vmatprep.subr.bf16.mxu0 0
      %1195 = vmatpush1.bf16.msra.mxu0 0
      %1196 = vmatprep.subr.bf16.mxu0 0
      %1197 = vmatpush1.bf16.msra.mxu0 0
      %1198 = vmatprep.subr.bf16.mxu0 0
      %1199 = vmatpush1.bf16.msra.mxu0 0
      %1200 = vmatprep.mubr.bf16.mxu0 0
      %1201 = vmatmul.mubr.bf16.gmra.mrb[0].mxu0 %v1166
      %v1202 = vpop.f32.mrb[0].mxu0
      %v1203 = vadd.f32 %v1163, %v1202
      %v1204 = vpop.f32.mrb[0].mxu0
      %v1205 = vadd.f32 %v1163, %v1204
      %v1206 = vpop.f32.mrb[0].mxu0
      %v1207 = vpop.f32.mrb[0].mxu0
      %1208 = vdwg.mxu0
      %1209 = vmatprep.subr.bf16.mxu0 %v1145
      %1210 = vmatpush1.bf16.msra.mxu0 %v1144
      %1211 = vmatprep.subr.bf16.mxu0 %v1149
      %1212 = vmatpush1.bf16.msra.mxu0 %v1148
      %1213 = vmatprep.subr.bf16.mxu0 %v1153
      %1214 = vmatpush1.bf16.msra.mxu0 %v1152
      %1215 = vmatprep.subr.bf16.mxu0 %v1157
      %1216 = vmatpush1.bf16.msra.mxu0 %v1156
      %1217 = vmatprep.subr.bf16.mxu0 0
      %1218 = vmatpush1.bf16.msra.mxu0 0
      %1219 = vmatprep.subr.bf16.mxu0 0
      %1220 = vmatpush1.bf16.msra.mxu0 0
      %1221 = vmatprep.subr.bf16.mxu0 0
      %1222 = vmatpush1.bf16.msra.mxu0 0
      %1223 = vmatprep.subr.bf16.mxu0 0
      %1224 = vmatpush1.bf16.msra.mxu0 0
      %1225 = vmatprep.subr.bf16.mxu0 0
      %1226 = vmatpush1.bf16.msra.mxu0 0
      %1227 = vmatprep.subr.bf16.mxu0 0
      %1228 = vmatpush1.bf16.msra.mxu0 0
      %1229 = vmatprep.subr.bf16.mxu0 0
      %1230 = vmatpush1.bf16.msra.mxu0 0
      %1231 = vmatprep.subr.bf16.mxu0 0
      %1232 = vmatpush1.bf16.msra.mxu0 0
      %1233 = vmatprep.subr.bf16.mxu0 0
      %1234 = vmatpush1.bf16.msra.mxu0 0
      %1235 = vmatprep.subr.bf16.mxu0 0
      %1236 = vmatpush1.bf16.msra.mxu0 0
      %1237 = vmatprep.subr.bf16.mxu0 0
      %1238 = vmatpush1.bf16.msra.mxu0 0
      %1239 = vmatprep.subr.bf16.mxu0 0
      %1240 = vmatpush1.bf16.msra.mxu0 0
      %1241 = vmatprep.mubr.bf16.mxu0 0
      %1242 = vmatmul.mubr.bf16.gmra.mrb[0].mxu0 %v1166
      %v1243 = vpop.f32.mrb[0].mxu0
      %v1244 = vadd.f32 %v1163, %v1243
      %v1245 = vpop.f32.mrb[0].mxu0
      %v1246 = vadd.f32 %v1163, %v1245
      %v1247 = vpop.f32.mrb[0].mxu0
      %v1248 = vpop.f32.mrb[0].mxu0
      %1249 = vdwg.mxu0
      %v1254 = vcombine.low %v1203, %v1205
      %v1255 = vcombine.low %v1244, %v1246
      %1258 = vst [vmem:[%s253] sm:$0x77] %v1254
      %1259 = vst [vmem:[%s253 + $0x8] sm:$0x77] %v1255
      %s1260 = smul.u32 4, %s17
      %p1261 = scmp.lt.s32.totalorder %s1260, 7
      %s1262 = scalar_select %p1261, %s1260, 7
      %s1263 = smul.addr %s1262, 4
      %s1264 = scalar_lea.vmem %s6, %s1263
      // Predicated region
      $region45: #{nerf_small_potential_forward.1} parent=43 // pred_check
        %p1265 = pneg %p166
      $region46: #{nerf_small_potential_forward.1} parent=43 // pred_check_branch
        %1267 = sbr.rel (%p1265) target = $region48
      $region47: #{nerf_small_potential_forward.1} parent=43 // pred_region
        %s1268 = smul.u32 4, %s17
      $region48: #{nerf_small_potential_forward.1} parent=43 // pred_fallthru
        _
    $region44: #{nerf_small_potential_forward.1} parent=5 // pred_fallthru
      _
    %p1269 = scmp.le.s32.totalorder 2, %s12
    // Predicated region
    $region49: #{nerf_small_potential_forward.1} parent=5 // pred_check
      %p1270 = pneg %p1269
    $region50: #{nerf_small_potential_forward.1} parent=5 // pred_check_branch
      %1272 = sbr.rel (%p1270) target = $region52
    $region51: #{nerf_small_potential_forward.1} parent=5 // pred_region
      %s1273 = ssub.s32 %s12, 2
      // Predicated region
      $region53: #{nerf_small_potential_forward.1} parent=51 // pred_check
        %p1274 = pneg %p172
      $region54: #{nerf_small_potential_forward.1} parent=51 // pred_check_branch
        %1276 = sbr.rel (%p1274) target = $region56
      $region55: #{nerf_small_potential_forward.1} parent=51 // pred_region
        %s1277 = smul.u32 4, %s18
        %p1278 = scmp.lt.s32.totalorder %s1277, 7
        %s1279 = scalar_select %p1278, %s1277, 7
        %s1280 = smul.addr %s1279, 4
        %s1281 = scalar_lea.vmem %s6, %s1280
      $region56: #{nerf_small_potential_forward.1} parent=51 // pred_fallthru
        _
    $region52: #{nerf_small_potential_forward.1} parent=5 // pred_fallthru
      _
  $region6: #{nerf_small_potential_forward.1} parent=0 // loop_footer
    %s16 = sadd.s32 1, %s12
  $region7: #{nerf_small_potential_forward.1} parent=0 // loop_footer_branch
    %11 = sbr.rel target = $region3
  $region8: #{nerf_small_potential_forward.1} parent=0 // loop_exit
    _

</llo_original>
